<compile_context>
chip_gen: v5e
topology: v5e:2x2
jax: 0.10.0
libtpu: 0.0.40
codegen_flags: <defaults>
</compile_context>

<pallas_src>
import functools
import math

import jax
import jax.numpy as jnp
import numpy as np
from jax.experimental import pallas as pl
from jax.experimental.pallas import tpu as pltpu


def _round_up(x, m):
    return (x + m - 1) // m * m


def _dorn_kernel(x_ref, w1_ref, b1_ref, wd_ref, bd_ref,
                 prob_ref, label_ref, depth_ref,
                 *, ord_num, beta, gamma, discretization):
    # ---- feature path stand-in (backbone + SceneUnderstandingModule):
    # layer 1 (cin=3 -> hidden) as per-channel VPU broadcast-FMAs in f32 (the
    # contraction is far too small for the MXU), layer 2 as the folded
    # "difference head" matmul on the MXU (bf16 operands, f32 accumulation).
    x = x_ref[...]                                            # (cin, tile_p) f32
    w1 = w1_ref[...]                                          # (hidden, cin) f32
    cin = w1.shape[1]
    h = b1_ref[...] + w1[:, 0:1] * x[0:1, :]                  # (hidden, tile_p)
    for c in range(1, cin):
        h = h + w1[:, c:c + 1] * x[c:c + 1, :]
    h = jnp.maximum(h, 0.0)                                   # ReLU (f32)

    # Folded ordinal head: d = (W2[:K] - W2[K:]) @ h + (b2[:K] - b2[K:]).
    d = jnp.dot(wd_ref[...], h.astype(jnp.bfloat16),
                preferred_element_type=jnp.float32) + bd_ref[...]  # (k_pad, tile_p)
    d = d[:ord_num, :]            # drop the internal sublane-pad rows (zeros)

    # ---- OrdinalRegressionLayer: 2-way softmax component 0 == sigmoid(d);
    # label == sum(prob > 0.5) == sum(d > 0) (strict '>' keeps the PyTorch
    # tie behaviour).
    prob_ref[...] = pl.reciprocal(1.0 + jnp.exp(-d),
                                  approx=True).astype(prob_ref.dtype)
    lbl = jnp.sum((d > 0.0).astype(jnp.float32), axis=0, keepdims=True)  # (1,tile_p)
    label_ref[...] = lbl.astype(jnp.int32)

    # ---- discretization decode, lane-dense (1, tile_p) rows.
    if discretization == "SID":
        log_beta = math.log(beta)
        t0 = jnp.exp(log_beta * lbl / ord_num)
        t1 = jnp.exp(log_beta * (lbl + 1.0) / ord_num)
    else:  # 'UD'
        t0 = 1.0 + (beta - 1.0) * lbl / ord_num
        t1 = 1.0 + (beta - 1.0) * (lbl + 1.0) / ord_num
    depth_ref[...] = (t0 + t1) * 0.5 - gamma


def dorn_forward(image, w1, b1, w2, b2, *, ord_num, beta, gamma,
                 discretization="SID", tile_p=2048, prob_dtype=jnp.float32):
    """DepthPredModel.forward (inference path).

    image: (N, 3, H, W) float32 (PyTorch NCHW).
    Stand-in feature layer:  w1: (hidden, 3) f32,       b1: (hidden, 1) f32
    Ordinal head:            w2: (2*ord_num, hidden) f32, b2: (2*ord_num, 1) f32
    """
    N, C, H, W = image.shape
    hidden, cin = w1.shape
    assert cin == C and w2.shape == (2 * ord_num, hidden)
    HW = H * W

    # Fold the 2-way [x0 | x1] head into a single difference matmul.
    # The difference is taken in f32 BEFORE the bf16 cast so near-boundary
    # label decisions are not perturbed by cancellation.
    wd = (w2[:ord_num] - w2[ord_num:]).astype(jnp.bfloat16)
    bd = (b2[:ord_num] - b2[ord_num:]).astype(jnp.float32)
    # Pad the ordinal axis to a sublane multiple for the MXU only; the pad rows
    # are zero and are sliced off inside the kernel before any store.
    k_pad = _round_up(ord_num, 8)
    if k_pad != ord_num:
        wd = jnp.pad(wd, ((0, k_pad - ord_num), (0, 0)))
        bd = jnp.pad(bd, ((0, k_pad - ord_num), (0, 0)))

    # Pixels-on-lanes layout: NCHW -> (N, C, H*W) is a free reshape.  No input
    # padding and no output cropping: the grid uses cdiv and Pallas masks the
    # partial boundary block, so the kernel is the single pass over HBM.
    x = image.reshape(N, C, HW)
    tile = min(tile_p, _round_up(HW, 128))
    grid = (N, pl.cdiv(HW, tile))

    kern = functools.partial(_dorn_kernel, ord_num=ord_num, beta=beta,
                             gamma=gamma, discretization=discretization)
    prob_bytes = jnp.dtype(prob_dtype).itemsize
    cost = pl.CostEstimate(
        flops=2 * N * HW * (cin * hidden + hidden * k_pad),
        transcendentals=N * HW * (ord_num + 2),
        bytes_accessed=(N * C * HW * 4                      # image in
                        + N * ord_num * HW * prob_bytes     # prob out
                        + 2 * N * HW * 4))                  # label + depth out

    prob_p, label_p, depth_p = pl.pallas_call(
        kern,
        out_shape=(
            jax.ShapeDtypeStruct((N, ord_num, HW), prob_dtype),
            jax.ShapeDtypeStruct((N, 1, HW), jnp.int32),
            jax.ShapeDtypeStruct((N, 1, HW), jnp.float32),
        ),
        grid_spec=pltpu.PrefetchScalarGridSpec(
            num_scalar_prefetch=0,
            grid=grid,
            in_specs=[
                pl.BlockSpec((None, C, tile), lambda n, p: (n, 0, p)),
                pl.BlockSpec((hidden, cin), lambda n, p: (0, 0)),
                pl.BlockSpec((hidden, 1), lambda n, p: (0, 0)),
                pl.BlockSpec((k_pad, hidden), lambda n, p: (0, 0)),
                pl.BlockSpec((k_pad, 1), lambda n, p: (0, 0)),
            ],
            out_specs=[
                pl.BlockSpec((None, ord_num, tile), lambda n, p: (n, 0, p)),
                pl.BlockSpec((None, 1, tile), lambda n, p: (n, 0, p)),
                pl.BlockSpec((None, 1, tile), lambda n, p: (n, 0, p)),
            ],
        ),
        compiler_params=pltpu.CompilerParams(
            dimension_semantics=("parallel", "parallel")),
        cost_estimate=cost,
    )(x, w1, b1, wd, bd)

    # prob lands directly in NKHW channel order; these reshapes are metadata
    # only (no HBM passes, no slices).
    prob = prob_p.reshape(N, ord_num, H, W)
    label = label_p.reshape(N, H, W)
    depth = depth_p.reshape(N, H, W)
    # Inference-mode return contract of DepthPredModel.forward.
    return {"target": [depth], "prob": [prob], "label": [label]}


def ref_forward(image, w1, b1, w2, b2, *, ord_num, beta, gamma,
                discretization="SID"):
    """Pure-JAX reference mirroring the kernel numerics (f32 layer 1 with the
    same accumulation order, folded bf16 difference head, exact softmax)."""
    N, C, H, W = image.shape
    x = image.reshape(N, C, H * W)
    h = b1[None] + w1[None, :, 0:1] * x[:, 0:1, :]
    for c in range(1, C):
        h = h + w1[None, :, c:c + 1] * x[:, c:c + 1, :]
    h = jnp.maximum(h, 0.0)
    wd = (w2[:ord_num] - w2[ord_num:]).astype(jnp.bfloat16)
    bd = (b2[:ord_num] - b2[ord_num:]).astype(jnp.float32)
    d = jnp.einsum("kh,nhp->nkp", wd, h.astype(jnp.bfloat16),
                   preferred_element_type=jnp.float32) + bd[None]
    # 2-way softmax over the [x0 | x1] split; component 0 == sigmoid(x0 - x1).
    prob = jax.nn.softmax(jnp.stack([d, jnp.zeros_like(d)], axis=1), axis=1)[:, 0]
    label = jnp.sum((d > 0.0).astype(jnp.int32), axis=1)   # == sum(prob > 0.5)
    lf = label.astype(jnp.float32)
    if discretization == "SID":
        t0 = jnp.exp(jnp.log(beta) * lf / ord_num)
        t1 = jnp.exp(jnp.log(beta) * (lf + 1.0) / ord_num)
    else:
        t0 = 1.0 + (beta - 1.0) * lf / ord_num
        t1 = 1.0 + (beta - 1.0) * (lf + 1.0) / ord_num
    depth = (t0 + t1) * 0.5 - gamma
    return (prob.reshape(N, ord_num, H, W),
            label.reshape(N, H, W),
            depth.reshape(N, H, W))


if __name__ == "__main__":
    # Small shapes consistent with the module's forward (N x 3 x H x W image).
    N, C, H, W = 2, 3, 16, 16
    ord_num = 8          # scaled down from 90 for the synthetic example
    beta, gamma = 80.0, 1.0
    hidden = 32

    key = jax.random.PRNGKey(0)
    k_img, k_w1, k_b1, k_w2, k_b2 = jax.random.split(key, 5)
    image = jax.random.normal(k_img, (N, C, H, W), jnp.float32)
    # Deterministic synthetic parameters (no checkpoint load).
    w1 = 0.5 * jax.random.normal(k_w1, (hidden, C), jnp.float32)
    b1 = 0.1 * jax.random.normal(k_b1, (hidden, 1), jnp.float32)
    w2 = 0.5 * jax.random.normal(k_w2, (2 * ord_num, hidden), jnp.float32)
    b2 = 0.1 * jax.random.normal(k_b2, (2 * ord_num, 1), jnp.float32)

    out = dorn_forward(image, w1, b1, w2, b2,
                       ord_num=ord_num, beta=beta, gamma=gamma, tile_p=2048)
    jax.block_until_ready(out)

    # Correctness check vs the pure-JAX reference.
    prob_r, label_r, depth_r = ref_forward(
        image, w1, b1, w2, b2, ord_num=ord_num, beta=beta, gamma=gamma)
    # prob uses an approximate (EUP) reciprocal in-kernel -> slightly looser tol.
    np.testing.assert_allclose(np.asarray(out["prob"][0]), np.asarray(prob_r),
                               rtol=2e-3, atol=2e-3)
    np.testing.assert_array_equal(np.asarray(out["label"][0]),
                                  np.asarray(label_r))
    np.testing.assert_allclose(np.asarray(out["target"][0]),
                               np.asarray(depth_r), rtol=1e-4, atol=1e-4)

    assert out["prob"][0].shape == (N, ord_num, H, W)
    assert out["label"][0].shape == (N, H, W)
    assert out["target"][0].shape == (N, H, W)
    print("KERNEL_OK")
</pallas_src>

<mosaic_0001>
module attributes {stable_mosaic.version = 11 : i64} {
  func.func @_dorn_kernel(%arg0: i32, %arg1: i32, %arg2: memref<1x3x256xf32, #tpu.memory_space<vmem>>, %arg3: memref<32x3xf32, #tpu.memory_space<vmem>>, %arg4: memref<32x1xf32, #tpu.memory_space<vmem>>, %arg5: memref<8x32xbf16, #tpu.memory_space<vmem>>, %arg6: memref<8x1xf32, #tpu.memory_space<vmem>>, %arg7: memref<1x8x256xf32, #tpu.memory_space<vmem>>, %arg8: memref<1x1x256xi32, #tpu.memory_space<vmem>>, %arg9: memref<1x1x256xf32, #tpu.memory_space<vmem>>) attributes {dimension_semantics = [#tpu.dimension_semantics<parallel>, #tpu.dimension_semantics<parallel>], iteration_bounds = array<i64: 2, 1>, scalar_prefetch = 0 : i64, scratch_operands = 0 : i64, tpu.core_type = #tpu.core_type<tc>, window_params = [{transform_indices = @transform_0, window_bounds = array<i64: 1, 3, 256>}, {pipeline_mode = #tpu.pipeline_mode<synchronous>, transform_indices = @transform_1, window_bounds = array<i64: 32, 3>}, {pipeline_mode = #tpu.pipeline_mode<synchronous>, transform_indices = @transform_2, window_bounds = array<i64: 32, 1>}, {pipeline_mode = #tpu.pipeline_mode<synchronous>, transform_indices = @transform_3, window_bounds = array<i64: 8, 32>}, {pipeline_mode = #tpu.pipeline_mode<synchronous>, transform_indices = @transform_4, window_bounds = array<i64: 8, 1>}, {transform_indices = @transform_5, window_bounds = array<i64: 1, 8, 256>}, {transform_indices = @transform_6, window_bounds = array<i64: 1, 1, 256>}, {transform_indices = @transform_7, window_bounds = array<i64: 1, 1, 256>}]} {
    %c0 = arith.constant 0 : index
    %c0_0 = arith.constant 0 : index
    %c0_1 = arith.constant 0 : index
    %0 = vector.load %arg2[%c0, %c0_0, %c0_1] : memref<1x3x256xf32, #tpu.memory_space<vmem>>, vector<1x3x256xf32>
    %1 = vector.shape_cast %0 : vector<1x3x256xf32> to vector<3x256xf32>
    %c0_2 = arith.constant 0 : index
    %c0_3 = arith.constant 0 : index
    %2 = vector.load %arg3[%c0_2, %c0_3] : memref<32x3xf32, #tpu.memory_space<vmem>>, vector<32x3xf32>
    %c0_4 = arith.constant 0 : index
    %c0_5 = arith.constant 0 : index
    %3 = vector.load %arg4[%c0_4, %c0_5] : memref<32x1xf32, #tpu.memory_space<vmem>>, vector<32x1xf32>
    %4 = vector.extract_strided_slice %2 {offsets = [0, 0], sizes = [32, 1], strides = [1, 1]} : vector<32x3xf32> to vector<32x1xf32>
    %5 = vector.extract_strided_slice %1 {offsets = [0, 0], sizes = [1, 256], strides = [1, 1]} : vector<3x256xf32> to vector<1x256xf32>
    %6 = vector.broadcast %4 : vector<32x1xf32> to vector<32x256xf32>
    %7 = vector.broadcast %5 : vector<1x256xf32> to vector<32x256xf32>
    %8 = arith.mulf %6, %7 : vector<32x256xf32>
    %9 = vector.broadcast %3 : vector<32x1xf32> to vector<32x256xf32>
    %10 = arith.addf %9, %8 : vector<32x256xf32>
    %11 = vector.extract_strided_slice %2 {offsets = [0, 1], sizes = [32, 1], strides = [1, 1]} : vector<32x3xf32> to vector<32x1xf32>
    %12 = vector.extract_strided_slice %1 {offsets = [1, 0], sizes = [1, 256], strides = [1, 1]} : vector<3x256xf32> to vector<1x256xf32>
    %13 = vector.broadcast %11 : vector<32x1xf32> to vector<32x256xf32>
    %14 = vector.broadcast %12 : vector<1x256xf32> to vector<32x256xf32>
    %15 = arith.mulf %13, %14 : vector<32x256xf32>
    %16 = arith.addf %10, %15 : vector<32x256xf32>
    %17 = vector.extract_strided_slice %2 {offsets = [0, 2], sizes = [32, 1], strides = [1, 1]} : vector<32x3xf32> to vector<32x1xf32>
    %18 = vector.extract_strided_slice %1 {offsets = [2, 0], sizes = [1, 256], strides = [1, 1]} : vector<3x256xf32> to vector<1x256xf32>
    %19 = vector.broadcast %17 : vector<32x1xf32> to vector<32x256xf32>
    %20 = vector.broadcast %18 : vector<1x256xf32> to vector<32x256xf32>
    %21 = arith.mulf %19, %20 : vector<32x256xf32>
    %22 = arith.addf %16, %21 : vector<32x256xf32>
    %cst = arith.constant 0.000000e+00 : f32
    %23 = vector.broadcast %cst : f32 to vector<32x256xf32>
    %24 = arith.maximumf %22, %23 : vector<32x256xf32>
    %c0_6 = arith.constant 0 : index
    %c0_7 = arith.constant 0 : index
    %25 = vector.load %arg5[%c0_6, %c0_7] : memref<8x32xbf16, #tpu.memory_space<vmem>>, vector<8x32xbf16>
    %26 = arith.truncf %24 : vector<32x256xf32> to vector<32x256xbf16>
    %cst_8 = arith.constant dense<0.000000e+00> : vector<8x256xf32>
    %27 = tpu.matmul %25, %26, %cst_8 {dimension_numbers = #tpu.dot_dimension_numbers<[1], [0], [0], [1], [0, 0, 1, 1], [], []>} : vector<8x32xbf16>, vector<32x256xbf16>, vector<8x256xf32> -> vector<8x256xf32>
    %c0_9 = arith.constant 0 : index
    %c0_10 = arith.constant 0 : index
    %28 = vector.load %arg6[%c0_9, %c0_10] : memref<8x1xf32, #tpu.memory_space<vmem>>, vector<8x1xf32>
    %29 = vector.broadcast %28 : vector<8x1xf32> to vector<8x256xf32>
    %30 = arith.addf %27, %29 : vector<8x256xf32>
    %cst_11 = arith.constant 0.000000e+00 : f32
    %31 = vector.broadcast %cst_11 : f32 to vector<8x256xf32>
    %32 = arith.subf %31, %30 : vector<8x256xf32>
    %33 = math.exp %32 : vector<8x256xf32>
    %cst_12 = arith.constant 1.000000e+00 : f32
    %34 = vector.broadcast %cst_12 : f32 to vector<8x256xf32>
    %35 = arith.addf %34, %33 : vector<8x256xf32>
    %36 = tpu.reciprocal %35 {approx = true} : vector<8x256xf32> -> vector<8x256xf32>
    %c0_13 = arith.constant 0 : index
    %c0_14 = arith.constant 0 : index
    %c0_15 = arith.constant 0 : index
    %37 = vector.load %arg7[%c0_13, %c0_14, %c0_15] : memref<1x8x256xf32, #tpu.memory_space<vmem>>, vector<1x8x256xf32>
    %38 = vector.shape_cast %37 : vector<1x8x256xf32> to vector<8x256xf32>
    %39 = vector.shape_cast %36 : vector<8x256xf32> to vector<1x8x256xf32>
    tpu.vector_store %arg7[%c0_13, %c0_14, %c0_15], %39 {strides = array<i32>} : memref<1x8x256xf32, #tpu.memory_space<vmem>>, vector<1x8x256xf32>,
    %cst_16 = arith.constant 0.000000e+00 : f32
    %40 = vector.broadcast %cst_16 : f32 to vector<8x256xf32>
    %41 = arith.cmpf ogt, %30, %40 : vector<8x256xf32>
    %42 = arith.extui %41 : vector<8x256xi1> to vector<8x256xi32>
    %43 = arith.sitofp %42 : vector<8x256xi32> to vector<8x256xf32>
    %cst_17 = arith.constant dense<0.000000e+00> : vector<256xf32>
    %44 = vector.multi_reduction <add>, %43, %cst_17 [0] : vector<8x256xf32> to vector<256xf32>
    %45 = vector.shape_cast %44 : vector<256xf32> to vector<1x256xf32>
    %46 = arith.fptosi %45 : vector<1x256xf32> to vector<1x256xi32>
    %c0_18 = arith.constant 0 : index
    %c0_19 = arith.constant 0 : index
    %c0_20 = arith.constant 0 : index
    %47 = vector.load %arg8[%c0_18, %c0_19, %c0_20] : memref<1x1x256xi32, #tpu.memory_space<vmem>>, vector<1x1x256xi32>
    %48 = vector.shape_cast %47 : vector<1x1x256xi32> to vector<1x256xi32>
    %49 = vector.shape_cast %46 : vector<1x256xi32> to vector<1x1x256xi32>
    tpu.vector_store %arg8[%c0_18, %c0_19, %c0_20], %49 {strides = array<i32>} : memref<1x1x256xi32, #tpu.memory_space<vmem>>, vector<1x1x256xi32>,
    %cst_21 = arith.constant 4.38202667 : f32
    %50 = vector.broadcast %cst_21 : f32 to vector<1x256xf32>
    %51 = arith.mulf %50, %45 : vector<1x256xf32>
    %cst_22 = arith.constant 8.000000e+00 : f32
    %52 = vector.broadcast %cst_22 : f32 to vector<1x256xf32>
    %53 = arith.divf %51, %52 : vector<1x256xf32>
    %54 = math.exp %53 : vector<1x256xf32>
    %cst_23 = arith.constant 1.000000e+00 : f32
    %55 = vector.broadcast %cst_23 : f32 to vector<1x256xf32>
    %56 = arith.addf %45, %55 : vector<1x256xf32>
    %cst_24 = arith.constant 4.38202667 : f32
    %57 = vector.broadcast %cst_24 : f32 to vector<1x256xf32>
    %58 = arith.mulf %57, %56 : vector<1x256xf32>
    %cst_25 = arith.constant 8.000000e+00 : f32
    %59 = vector.broadcast %cst_25 : f32 to vector<1x256xf32>
    %60 = arith.divf %58, %59 : vector<1x256xf32>
    %61 = math.exp %60 : vector<1x256xf32>
    %62 = arith.addf %54, %61 : vector<1x256xf32>
    %cst_26 = arith.constant 5.000000e-01 : f32
    %63 = vector.broadcast %cst_26 : f32 to vector<1x256xf32>
    %64 = arith.mulf %62, %63 : vector<1x256xf32>
    %cst_27 = arith.constant 1.000000e+00 : f32
    %65 = vector.broadcast %cst_27 : f32 to vector<1x256xf32>
    %66 = arith.subf %64, %65 : vector<1x256xf32>
    %c0_28 = arith.constant 0 : index
    %c0_29 = arith.constant 0 : index
    %c0_30 = arith.constant 0 : index
    %67 = vector.load %arg9[%c0_28, %c0_29, %c0_30] : memref<1x1x256xf32, #tpu.memory_space<vmem>>, vector<1x1x256xf32>
    %68 = vector.shape_cast %67 : vector<1x1x256xf32> to vector<1x256xf32>
    %69 = vector.shape_cast %66 : vector<1x256xf32> to vector<1x1x256xf32>
    tpu.vector_store %arg9[%c0_28, %c0_29, %c0_30], %69 {strides = array<i32>} : memref<1x1x256xf32, #tpu.memory_space<vmem>>, vector<1x1x256xf32>,
    return
  }
  func.func @transform_0(%arg0: i32, %arg1: i32) -> (i32, i32, i32) {
    %c0_i32 = arith.constant 0 : i32
    %c0_i32_0 = arith.constant 0 : i32
    return %arg0, %c0_i32, %arg1 : i32, i32, i32
  }
  func.func @transform_1(%arg0: i32, %arg1: i32) -> (i32, i32) {
    %c0_i32 = arith.constant 0 : i32
    %c0_i32_0 = arith.constant 0 : i32
    %c0_i32_1 = arith.constant 0 : i32
    return %c0_i32, %c0_i32_0 : i32, i32
  }
  func.func @transform_2(%arg0: i32, %arg1: i32) -> (i32, i32) {
    %c0_i32 = arith.constant 0 : i32
    %c0_i32_0 = arith.constant 0 : i32
    %c0_i32_1 = arith.constant 0 : i32
    return %c0_i32, %c0_i32_0 : i32, i32
  }
  func.func @transform_3(%arg0: i32, %arg1: i32) -> (i32, i32) {
    %c0_i32 = arith.constant 0 : i32
    %c0_i32_0 = arith.constant 0 : i32
    %c0_i32_1 = arith.constant 0 : i32
    return %c0_i32, %c0_i32_0 : i32, i32
  }
  func.func @transform_4(%arg0: i32, %arg1: i32) -> (i32, i32) {
    %c0_i32 = arith.constant 0 : i32
    %c0_i32_0 = arith.constant 0 : i32
    %c0_i32_1 = arith.constant 0 : i32
    return %c0_i32, %c0_i32_0 : i32, i32
  }
  func.func @transform_5(%arg0: i32, %arg1: i32) -> (i32, i32, i32) {
    %c0_i32 = arith.constant 0 : i32
    %c0_i32_0 = arith.constant 0 : i32
    return %arg0, %c0_i32, %arg1 : i32, i32, i32
  }
  func.func @transform_6(%arg0: i32, %arg1: i32) -> (i32, i32, i32) {
    %c0_i32 = arith.constant 0 : i32
    %c0_i32_0 = arith.constant 0 : i32
    return %arg0, %c0_i32, %arg1 : i32, i32, i32
  }
  func.func @transform_7(%arg0: i32, %arg1: i32) -> (i32, i32, i32) {
    %c0_i32 = arith.constant 0 : i32
    %c0_i32_0 = arith.constant 0 : i32
    return %arg0, %c0_i32, %arg1 : i32, i32, i32
  }
}

</mosaic_0001>

<llo_original>
// kernel: tpu_custom_call.1
$region0: #{tpu_custom_call.1}
  #allocation0 [shape = 'u32[]', space=smem, size = 0x4, offset = 0x4, fixed_abs, tag = 'smem constant byte address 0x4 - core index']
  #allocation1 [shape = 'u32[72,128]{1,0:T(1,128)}', space=vmem, size = 0x9000, scoped, tag = 'internal scratch']
  %s0 = inlined_call_operand.vmem [shape: f32[2,3,256], index: 0, kind: input, shape index: {}]
  %s1 = inlined_call_operand.vmem [shape: f32[32,3], index: 1, kind: input, shape index: {}]
  %s2 = inlined_call_operand.vmem [shape: f32[32,1], index: 2, kind: input, shape index: {}]
  %s3 = inlined_call_operand.vmem [shape: bf16[8,32], index: 3, kind: input, shape index: {}]
  %s4 = inlined_call_operand.vmem [shape: f32[8,1], index: 4, kind: input, shape index: {}]
  %s5 = inlined_call_operand.hbm [shape: f32[2,8,256], index: 5, kind: output, shape index: {0}]
  %s6 = inlined_call_operand.hbm [shape: s32[2,1,256], index: 6, kind: output, shape index: {1}]
  %s7 = inlined_call_operand.hbm [shape: f32[2,1,256], index: 7, kind: output, shape index: {2}]
  %8 = xla_tuple %s5, %s6, %s7
  %s9 = sld [smem:[#allocation0]]
  $region69: #{tpu_custom_call.1} parent=0
    _
  %s11 = ssub.s32 1, %s9
  %s12 = scalar_select 0, %s11, %s9
  $region1: #{tpu_custom_call.1} parent=0
    #allocation2 [shape = 'u8[16384]{0}', space=vmem, size = 0x4000, scoped, tag = 'output window, operand 0']
    #allocation3 [shape = 's32[2]{0}', space=sflag, size = 0x8, scoped, tag = 'scoped memory for tpu_custom_call.1']
    #allocation4 [shape = 'u8[2048]{0}', space=vmem, size = 0x800, scoped, tag = 'output window, operand 1']
    #allocation5 [shape = 's32[2]{0}', space=sflag, size = 0x8, scoped, tag = 'scoped memory for tpu_custom_call.1']
    #allocation6 [shape = 'u8[2048]{0}', space=vmem, size = 0x800, scoped, tag = 'output window, operand 2']
    %13 = vsyncpa [#allocation3], 0
    %s14 = scalar_lea.sflag [#allocation3], 1
    %15 = vsyncpa %s14, 0
    %16 = vsyncpa [#allocation5], 0
    %s17 = scalar_lea.sflag [#allocation5], 1
    %18 = vsyncpa %s17, 0
    loop: start=0, step=1, limit=4
    $region2: #{tpu_custom_call.1} parent=1 // loop_pre_header
      _
    $region3: #{tpu_custom_call.1} parent=1 // loop_header
      %s20 = sphi 0, %s24
      %p21 = scmp.ge.s32.totalorder %s20, 4
      %s27 = sphi 0, %s39
      %s28 = sphi 0, %s35
      %s29 = sphi 0, %s27
      %s30 = sphi 0, %s28
      %s31 = sphi 0, %s29
      %s32 = sphi 0, %s30
      %s44 = sphi 0, %s46
      %s47 = sphi 0, %s44
      %s48 = sphi 0, %s47
      %s64 = sphi 0, %s48
      %s68 = sphi 0, %s68
      %s70 = sphi 0, %s68
      %s71 = sphi 0, %s70
      %s85 = sphi 0, %s71
      %s89 = sphi 0, %s89
      %s91 = sphi 0, %s89
      %s92 = sphi 0, %s91
      %s106 = sphi 0, %s92
      %s110 = sphi 0, %s110
      %s112 = sphi 0, %s110
      %s113 = sphi 0, %s112
      %s127 = sphi 0, %s113
      %s131 = sphi 0, %s131
      %s133 = sphi 0, %s131
      %s134 = sphi 0, %s133
      %s148 = sphi 0, %s134
      %s156 = sphi 0, %s158
      %s159 = sphi 0, %s156
      %s160 = sphi 0, %s159
      %s176 = sphi 0, %s160
      %s184 = sphi 0, %s186
      %s187 = sphi 0, %s184
      %s188 = sphi 0, %s187
      %s204 = sphi 0, %s188
      %s212 = sphi 0, %s214
      %s215 = sphi 0, %s212
      %s216 = sphi 0, %s215
      %s232 = sphi 0, %s216
    $region4: #{tpu_custom_call.1} parent=1 // loop_header_branch
      %23 = sbr.rel (%p21) target = $region8
    $region5: #{tpu_custom_call.1} parent=1 // loop_body
      %s25 = ssub.s32 %s20, 1
      %s26 = ssub.s32 %s20, 2
      %s33 = sadd.s32 1, %s28
      %p34 = scmp.ge.s32.totalorder %s33, 1
      %s35 = scalar_select %p34, 0, %s33
      %s36 = sadd.s32 1, %s27
      %s37 = scalar_select %p34, %s36, %s27
      %p38 = scmp.ge.s32.totalorder %s37, 2
      %s39 = scalar_select %p38, 0, %s37
      %s40 = ssub.s32 %s27, %s39
      %s41 = ssub.s32 %s28, %s35
      %s42 = sor.u32 %s40, %s41
      %p43 = scmp.eq.s32.totalorder %s42, 0
      %s45 = sadd.s32 %s44, 1
      %s46 = scalar_select %p43, %s44, %s45
      %p49 = pneg %p43
      %p50 = scmp.eq.s32.totalorder %s20, 1
      %p51 = por %p49, %p50
      %p52 = scmp.ne.s32.totalorder %s44, %s47
      %p53 = scmp.eq.s32.totalorder %s20, 0
      %p54 = por %p52, %p53
      %p55 = scmp.ne.s32.totalorder %s44, %s47
      %p56 = scmp.eq.s32.totalorder %s25, 1
      %p57 = por %p55, %p56
      %p58 = scmp.ne.s32.totalorder %s47, %s48
      %p59 = scmp.eq.s32.totalorder %s25, 0
      %p60 = por %p58, %p59
      %p61 = scmp.ne.s32.totalorder %s47, %s48
      %p62 = scmp.eq.s32.totalorder %s26, 1
      %p63 = por %p61, %p62
      %p65 = scmp.ne.s32.totalorder %s48, %s64
      %p66 = scmp.eq.s32.totalorder %s26, 0
      %p67 = por %p65, %p66
      %s69 = sadd.s32 %s68, 1
      %p72 = scmp.eq.s32.totalorder %s20, 1
      %p73 = scmp.ne.s32.totalorder %s68, %s70
      %p74 = scmp.eq.s32.totalorder %s20, 0
      %p75 = por %p73, %p74
      %p76 = scmp.ne.s32.totalorder %s68, %s70
      %p77 = scmp.eq.s32.totalorder %s25, 1
      %p78 = por %p76, %p77
      %p79 = scmp.ne.s32.totalorder %s70, %s71
      %p80 = scmp.eq.s32.totalorder %s25, 0
      %p81 = por %p79, %p80
      %p82 = scmp.ne.s32.totalorder %s70, %s71
      %p83 = scmp.eq.s32.totalorder %s26, 1
      %p84 = por %p82, %p83
      %p86 = scmp.ne.s32.totalorder %s71, %s85
      %p87 = scmp.eq.s32.totalorder %s26, 0
      %p88 = por %p86, %p87
      %s90 = sadd.s32 %s89, 1
      %p93 = scmp.eq.s32.totalorder %s20, 1
      %p94 = scmp.ne.s32.totalorder %s89, %s91
      %p95 = scmp.eq.s32.totalorder %s20, 0
      %p96 = por %p94, %p95
      %p97 = scmp.ne.s32.totalorder %s89, %s91
      %p98 = scmp.eq.s32.totalorder %s25, 1
      %p99 = por %p97, %p98
      %p100 = scmp.ne.s32.totalorder %s91, %s92
      %p101 = scmp.eq.s32.totalorder %s25, 0
      %p102 = por %p100, %p101
      %p103 = scmp.ne.s32.totalorder %s91, %s92
      %p104 = scmp.eq.s32.totalorder %s26, 1
      %p105 = por %p103, %p104
      %p107 = scmp.ne.s32.totalorder %s92, %s106
      %p108 = scmp.eq.s32.totalorder %s26, 0
      %p109 = por %p107, %p108
      %s111 = sadd.s32 %s110, 1
      %p114 = scmp.eq.s32.totalorder %s20, 1
      %p115 = scmp.ne.s32.totalorder %s110, %s112
      %p116 = scmp.eq.s32.totalorder %s20, 0
      %p117 = por %p115, %p116
      %p118 = scmp.ne.s32.totalorder %s110, %s112
      %p119 = scmp.eq.s32.totalorder %s25, 1
      %p120 = por %p118, %p119
      %p121 = scmp.ne.s32.totalorder %s112, %s113
      %p122 = scmp.eq.s32.totalorder %s25, 0
      %p123 = por %p121, %p122
      %p124 = scmp.ne.s32.totalorder %s112, %s113
      %p125 = scmp.eq.s32.totalorder %s26, 1
      %p126 = por %p124, %p125
      %p128 = scmp.ne.s32.totalorder %s113, %s127
      %p129 = scmp.eq.s32.totalorder %s26, 0
      %p130 = por %p128, %p129
      %s132 = sadd.s32 %s131, 1
      %p135 = scmp.eq.s32.totalorder %s20, 1
      %p136 = scmp.ne.s32.totalorder %s131, %s133
      %p137 = scmp.eq.s32.totalorder %s20, 0
      %p138 = por %p136, %p137
      %p139 = scmp.ne.s32.totalorder %s131, %s133
      %p140 = scmp.eq.s32.totalorder %s25, 1
      %p141 = por %p139, %p140
      %p142 = scmp.ne.s32.totalorder %s133, %s134
      %p143 = scmp.eq.s32.totalorder %s25, 0
      %p144 = por %p142, %p143
      %p145 = scmp.ne.s32.totalorder %s133, %s134
      %p146 = scmp.eq.s32.totalorder %s26, 1
      %p147 = por %p145, %p146
      %p149 = scmp.ne.s32.totalorder %s134, %s148
      %p150 = scmp.eq.s32.totalorder %s26, 0
      %p151 = por %p149, %p150
      %s152 = ssub.s32 %s27, %s39
      %s153 = ssub.s32 %s28, %s35
      %s154 = sor.u32 %s152, %s153
      %p155 = scmp.eq.s32.totalorder %s154, 0
      %s157 = sadd.s32 %s156, 1
      %s158 = scalar_select %p155, %s156, %s157
      %p161 = pneg %p155
      %p162 = scmp.eq.s32.totalorder %s20, 1
      %p163 = por %p161, %p162
      %p164 = scmp.ne.s32.totalorder %s156, %s159
      %p165 = scmp.eq.s32.totalorder %s20, 0
      %p166 = por %p164, %p165
      %p167 = scmp.ne.s32.totalorder %s156, %s159
      %p168 = scmp.eq.s32.totalorder %s25, 1
      %p169 = por %p167, %p168
      %p170 = scmp.ne.s32.totalorder %s159, %s160
      %p171 = scmp.eq.s32.totalorder %s25, 0
      %p172 = por %p170, %p171
      %p173 = scmp.ne.s32.totalorder %s159, %s160
      %p174 = scmp.eq.s32.totalorder %s26, 1
      %p175 = por %p173, %p174
      %p177 = scmp.ne.s32.totalorder %s160, %s176
      %p178 = scmp.eq.s32.totalorder %s26, 0
      %p179 = por %p177, %p178
      %s180 = ssub.s32 %s27, %s39
      %s181 = ssub.s32 %s28, %s35
      %s182 = sor.u32 %s180, %s181
      %p183 = scmp.eq.s32.totalorder %s182, 0
      %s185 = sadd.s32 %s184, 1
      %s186 = scalar_select %p183, %s184, %s185
      %p189 = pneg %p183
      %p190 = scmp.eq.s32.totalorder %s20, 1
      %p191 = por %p189, %p190
      %p192 = scmp.ne.s32.totalorder %s184, %s187
      %p193 = scmp.eq.s32.totalorder %s20, 0
      %p194 = por %p192, %p193
      %p195 = scmp.ne.s32.totalorder %s184, %s187
      %p196 = scmp.eq.s32.totalorder %s25, 1
      %p197 = por %p195, %p196
      %p198 = scmp.ne.s32.totalorder %s187, %s188
      %p199 = scmp.eq.s32.totalorder %s25, 0
      %p200 = por %p198, %p199
      %p201 = scmp.ne.s32.totalorder %s187, %s188
      %p202 = scmp.eq.s32.totalorder %s26, 1
      %p203 = por %p201, %p202
      %p205 = scmp.ne.s32.totalorder %s188, %s204
      %p206 = scmp.eq.s32.totalorder %s26, 0
      %p207 = por %p205, %p206
      %s208 = ssub.s32 %s27, %s39
      %s209 = ssub.s32 %s28, %s35
      %s210 = sor.u32 %s208, %s209
      %p211 = scmp.eq.s32.totalorder %s210, 0
      %s213 = sadd.s32 %s212, 1
      %s214 = scalar_select %p211, %s212, %s213
      %p217 = pneg %p211
      %p218 = scmp.eq.s32.totalorder %s20, 1
      %p219 = por %p217, %p218
      %p220 = scmp.ne.s32.totalorder %s212, %s215
      %p221 = scmp.eq.s32.totalorder %s20, 0
      %p222 = por %p220, %p221
      %p223 = scmp.ne.s32.totalorder %s212, %s215
      %p224 = scmp.eq.s32.totalorder %s25, 1
      %p225 = por %p223, %p224
      %p226 = scmp.ne.s32.totalorder %s215, %s216
      %p227 = scmp.eq.s32.totalorder %s25, 0
      %p228 = por %p226, %p227
      %p229 = scmp.ne.s32.totalorder %s215, %s216
      %p230 = scmp.eq.s32.totalorder %s26, 1
      %p231 = por %p229, %p230
      %p233 = scmp.ne.s32.totalorder %s216, %s232
      %p234 = scmp.eq.s32.totalorder %s26, 0
      %p235 = por %p233, %p234
      %p236 = scmp.le.s32.totalorder 1, %s20
      %p237 = scmp.lt.s32.totalorder %s20, 3
      %p238 = pnand %p236, %p237
      %p239 = pneg %p238
      // Predicated region
      $region9: #{tpu_custom_call.1} parent=5 // pred_check
        _
      $region10: #{tpu_custom_call.1} parent=5 // pred_check_branch
        %241 = sbr.rel (%p238) target = $region12
      $region11: #{tpu_custom_call.1} parent=5 // pred_region
        %s242 = ssub.s32 %s20, 1
        // Predicated region
        $region13: #{tpu_custom_call.1} parent=11 // pred_check
          %p243 = pneg %p81
        $region14: #{tpu_custom_call.1} parent=11 // pred_check_branch
          %245 = sbr.rel (%p243) target = $region16
        $region15: #{tpu_custom_call.1} parent=11 // pred_region
          _
        $region16: #{tpu_custom_call.1} parent=11 // pred_fallthru
          _
        // Predicated region
        $region17: #{tpu_custom_call.1} parent=11 // pred_check
          %p246 = pneg %p102
        $region18: #{tpu_custom_call.1} parent=11 // pred_check_branch
          %248 = sbr.rel (%p246) target = $region20
        $region19: #{tpu_custom_call.1} parent=11 // pred_region
          _
        $region20: #{tpu_custom_call.1} parent=11 // pred_fallthru
          _
        // Predicated region
        $region21: #{tpu_custom_call.1} parent=11 // pred_check
          %p249 = pneg %p123
        $region22: #{tpu_custom_call.1} parent=11 // pred_check_branch
          %251 = sbr.rel (%p249) target = $region24
        $region23: #{tpu_custom_call.1} parent=11 // pred_region
          _
        $region24: #{tpu_custom_call.1} parent=11 // pred_fallthru
          _
        // Predicated region
        $region25: #{tpu_custom_call.1} parent=11 // pred_check
          %p252 = pneg %p144
        $region26: #{tpu_custom_call.1} parent=11 // pred_check_branch
          %254 = sbr.rel (%p252) target = $region28
        $region27: #{tpu_custom_call.1} parent=11 // pred_region
          _
        $region28: #{tpu_custom_call.1} parent=11 // pred_fallthru
          _
      $region12: #{tpu_custom_call.1} parent=5 // pred_fallthru
        _
      %p255 = scmp.lt.s32.totalorder %s20, 2
      // Predicated region
      $region29: #{tpu_custom_call.1} parent=5 // pred_check
        %p256 = pneg %p255
      $region30: #{tpu_custom_call.1} parent=5 // pred_check_branch
        %258 = sbr.rel (%p256) target = $region32
      $region31: #{tpu_custom_call.1} parent=5 // pred_region
        // Predicated region
        $region33: #{tpu_custom_call.1} parent=31 // pred_check
          %p259 = pneg %p54
        $region34: #{tpu_custom_call.1} parent=31 // pred_check_branch
          %261 = sbr.rel (%p259) target = $region36
        $region35: #{tpu_custom_call.1} parent=31 // pred_region
          %s262 = smul.u32 2, %s28
          %p263 = scmp.lt.s32.totalorder %s27, 1
          %s264 = scalar_select %p263, %s27, 1
          %p265 = scmp.lt.s32.totalorder %s262, 1
          %s266 = scalar_select %p265, %s262, 1
          %s267 = smul.addr %s264, 2
          %s268 = sadd.s32 %s266, %s267
          %s269 = smul.addr %s268, 4
          %s270 = scalar_lea.vmem %s0, %s269
          %s271 = smul.u32 2, %s28
        $region36: #{tpu_custom_call.1} parent=31 // pred_fallthru
          _
      $region32: #{tpu_custom_call.1} parent=5 // pred_fallthru
        _
      %p272 = scmp.le.s32.totalorder 1, %s20
      %p273 = scmp.lt.s32.totalorder %s20, 3
      %p274 = pnand %p272, %p273
      %p275 = pneg %p274
      // Predicated region
      $region37: #{tpu_custom_call.1} parent=5 // pred_check
        _
      $region38: #{tpu_custom_call.1} parent=5 // pred_check_branch
        %277 = sbr.rel (%p274) target = $region40
      $region39: #{tpu_custom_call.1} parent=5 // pred_region
        %s278 = ssub.s32 %s20, 1
        %s279 = smul.u32 2, %s30
        %p280 = scmp.lt.s32.totalorder %s29, 1
        %s281 = scalar_select %p280, %s29, 1
        %p282 = scmp.lt.s32.totalorder %s279, 1
        %s283 = scalar_select %p282, %s279, 1
        %s284 = smul.addr %s281, 2
        %s285 = sadd.s32 %s283, %s284
        %s286 = smul.addr %s285, 4
        %s287 = scalar_lea.vmem %s0, %s286
        %p288 = pneg %p60
        %p289 = pneg %p57
        %p290 = pneg %p81
        %p291 = pneg %p78
        %p292 = pneg %p102
        %p293 = pneg %p99
        %p294 = pneg %p123
        %p295 = pneg %p120
        %p296 = pneg %p144
        %p297 = pneg %p141
        %p298 = pneg %p172
        %p299 = pneg %p169
        %s300 = sand.u32 %s159, 1
        %s301 = scalar_lea.sflag [#allocation3], %s300
        %s302 = sand.u32 %s159, 1
        %s303 = smul.addr %s302, 16
        %s304 = scalar_lea.vmem [#allocation2], %s303
        %p305 = pneg %p200
        %p306 = pneg %p197
        %s307 = sand.u32 %s25, 1
        %s308 = scalar_lea.sflag [#allocation5], %s307
        %s309 = sand.u32 %s187, 1
        %s310 = smul.addr %s309, 2
        %s311 = scalar_lea.vmem [#allocation4], %s310
        %p312 = pneg %p228
        %p313 = pneg %p225
        %s314 = sand.u32 %s25, 1
        %s315 = scalar_lea.sflag [#allocation5], %s314
        %s316 = sand.u32 %s215, 1
        %s317 = smul.addr %s316, 2
        %s318 = scalar_lea.vmem [#allocation6], %s317
        %s319 = smul.u32 2, %s30
        %p320 = scmp.lt.s32.totalorder %s29, 1
        %s321 = scalar_select %p320, %s29, 1
        %p322 = scmp.lt.s32.totalorder %s319, 1
        %s323 = scalar_select %p322, %s319, 1
        %s324 = smul.addr %s321, 2
        %s325 = sadd.s32 %s323, %s324
        %s326 = smul.addr %s325, 4
        %s327 = scalar_lea.vmem %s0, %s326
        %s328 = smul.u32 2, %s30
        %s329 = smul.u32 2, %s30
        %s330 = smul.u32 2, %s30
        %s331 = smul.u32 2, %s30
        %v333 = vld [vmem:[%s327] sm:$0x77]
        %v334 = vld [vmem:[%s1] sm:$0xff]
        %v335 = vld [vmem:[%s1 + $0x8] sm:$0xff]
        %v336 = vld [vmem:[%s1 + $0x10] sm:$0xff]
        %v337 = vld [vmem:[%s1 + $0x18] sm:$0xff]
        %v338 = vld [vmem:[%s2] sm:$0xff]
        %v339 = vld [vmem:[%s2 + $0x8] sm:$0xff]
        %v340 = vld [vmem:[%s2 + $0x10] sm:$0xff]
        %v341 = vld [vmem:[%s2 + $0x18] sm:$0xff]
        %343 = vset.pattern.permute.xlu0 0
        %344 = vperm.xlu0 %343, %v334
        %v345 = vpop.permute.xlu0 %344
        %348 = vset.pattern.permute.xlu0 0
        %349 = vperm.xlu0 %348, %v335
        %v350 = vpop.permute.xlu0 %349
        %353 = vset.pattern.permute.xlu0 0
        %354 = vperm.xlu0 %353, %v336
        %v355 = vpop.permute.xlu0 %354
        %358 = vset.pattern.permute.xlu0 0
        %359 = vperm.xlu0 %358, %v337
        %v360 = vpop.permute.xlu0 %359
        %v363 = vperm.slane %v333, 0
        %v364 = vperm.slane %v333, 4
        %v367 = vperm.slane %v363, 0
        %v368 = vperm.slane %v364, 0
        %v369 = vmul.f32 %v345, %v367
        %v370 = vmul.f32 %v345, %v368
        %v371 = vmul.f32 %v350, %v367
        %v372 = vmul.f32 %v350, %v368
        %v373 = vmul.f32 %v355, %v367
        %v374 = vmul.f32 %v355, %v368
        %v375 = vmul.f32 %v360, %v367
        %v376 = vmul.f32 %v360, %v368
        %378 = vset.pattern.permute.xlu0 0
        %379 = vperm.xlu0 %378, %v338
        %v380 = vpop.permute.xlu0 %379
        %383 = vset.pattern.permute.xlu0 0
        %384 = vperm.xlu0 %383, %v339
        %v385 = vpop.permute.xlu0 %384
        %388 = vset.pattern.permute.xlu0 0
        %389 = vperm.xlu0 %388, %v340
        %v390 = vpop.permute.xlu0 %389
        %393 = vset.pattern.permute.xlu0 0
        %394 = vperm.xlu0 %393, %v341
        %v395 = vpop.permute.xlu0 %394
        %v397 = vadd.f32 %v380, %v369
        %v398 = vadd.f32 %v380, %v370
        %v399 = vadd.f32 %v385, %v371
        %v400 = vadd.f32 %v385, %v372
        %v401 = vadd.f32 %v390, %v373
        %v402 = vadd.f32 %v390, %v374
        %v403 = vadd.f32 %v395, %v375
        %v404 = vadd.f32 %v395, %v376
        %405 = vset.pattern.permute.xlu0 1
        %406 = vperm.xlu0 %405, %v334
        %v407 = vpop.permute.xlu0 %406
        %409 = vset.pattern.permute.xlu0 1
        %410 = vperm.xlu0 %409, %v335
        %v411 = vpop.permute.xlu0 %410
        %413 = vset.pattern.permute.xlu0 1
        %414 = vperm.xlu0 %413, %v336
        %v415 = vpop.permute.xlu0 %414
        %417 = vset.pattern.permute.xlu0 1
        %418 = vperm.xlu0 %417, %v337
        %v419 = vpop.permute.xlu0 %418
        %v421 = vperm.slane %v333, 1
        %v422 = vperm.slane %v333, 5
        %v425 = vperm.slane %v421, 1
        %v426 = vperm.slane %v422, 1
        %v427 = vmul.f32 %v407, %v425
        %v428 = vmul.f32 %v407, %v426
        %v429 = vmul.f32 %v411, %v425
        %v430 = vmul.f32 %v411, %v426
        %v431 = vmul.f32 %v415, %v425
        %v432 = vmul.f32 %v415, %v426
        %v433 = vmul.f32 %v419, %v425
        %v434 = vmul.f32 %v419, %v426
        %v435 = vadd.f32 %v397, %v427
        %v436 = vadd.f32 %v398, %v428
        %v437 = vadd.f32 %v399, %v429
        %v438 = vadd.f32 %v400, %v430
        %v439 = vadd.f32 %v401, %v431
        %v440 = vadd.f32 %v402, %v432
        %v441 = vadd.f32 %v403, %v433
        %v442 = vadd.f32 %v404, %v434
        %443 = vset.pattern.permute.xlu0 2
        %444 = vperm.xlu0 %443, %v334
        %v445 = vpop.permute.xlu0 %444
        %447 = vset.pattern.permute.xlu0 2
        %448 = vperm.xlu0 %447, %v335
        %v449 = vpop.permute.xlu0 %448
        %451 = vset.pattern.permute.xlu0 2
        %452 = vperm.xlu0 %451, %v336
        %v453 = vpop.permute.xlu0 %452
        %455 = vset.pattern.permute.xlu0 2
        %456 = vperm.xlu0 %455, %v337
        %v457 = vpop.permute.xlu0 %456
        %v459 = vperm.slane %v333, 2
        %v460 = vperm.slane %v333, 6
        %v463 = vperm.slane %v459, 2
        %v464 = vperm.slane %v460, 2
        %v465 = vmul.f32 %v445, %v463
        %v466 = vmul.f32 %v445, %v464
        %v467 = vmul.f32 %v449, %v463
        %v468 = vmul.f32 %v449, %v464
        %v469 = vmul.f32 %v453, %v463
        %v470 = vmul.f32 %v453, %v464
        %v471 = vmul.f32 %v457, %v463
        %v472 = vmul.f32 %v457, %v464
        %v473 = vadd.f32 %v435, %v465
        %v474 = vadd.f32 %v436, %v466
        %v475 = vadd.f32 %v437, %v467
        %v476 = vadd.f32 %v438, %v468
        %v477 = vadd.f32 %v439, %v469
        %v478 = vadd.f32 %v440, %v470
        %v479 = vadd.f32 %v441, %v471
        %v480 = vadd.f32 %v442, %v472
        %v481 = vmax.f32 %v473, 0.0
        %v482 = vmax.f32 %v474, 0.0
        %v483 = vmax.f32 %v475, 0.0
        %v484 = vmax.f32 %v476, 0.0
        %v485 = vmax.f32 %v477, 0.0
        %v486 = vmax.f32 %v478, 0.0
        %v487 = vmax.f32 %v479, 0.0
        %v488 = vmax.f32 %v480, 0.0
        %v489 = vld [vmem:[%s3] sm:$0xf]
        %v490 = vpack.c.bf16 %v483, %v481
        %v491 = vpack.c.bf16 %v484, %v482
        %v492 = vpack.c.bf16 %v487, %v485
        %v493 = vpack.c.bf16 %v488, %v486
        %v494 = vld [vmem:[%s4] sm:$0xff]
        %496 = vset.pattern.permute.xlu0 0
        %497 = vperm.xlu0 %496, %v494
        %v498 = vpop.permute.xlu0 %497
        %vm500 = vcmask 261120
        %v502 = vsel %vm500, %v489, 0
        %504 = vmatpush.bf16.msra.mxu0 0
        %505 = vmatpush.bf16.msra.mxu0 0
        %506 = vmatpush.bf16.msra.mxu0 0
        %507 = vmatpush.bf16.msra.mxu0 0
        %508 = vmatpush.bf16.msra.mxu0 0
        %509 = vmatpush.bf16.msra.mxu0 0
        %510 = vmatpush.bf16.msra.mxu0 %v492
        %511 = vmatpush.bf16.msra.mxu0 %v490
        %512 = vmatmul.bf16.gmra.mxu0 %v502
        %v513 = vpop.f32.mrf.mxu0
        %v514 = vadd.f32 %v498, %v513
        %v515 = vpop.f32.mrf.mxu0
        %516 = vdwg.mxu0
        %517 = vmatpush.bf16.msra.mxu0 0
        %518 = vmatpush.bf16.msra.mxu0 0
        %519 = vmatpush.bf16.msra.mxu0 0
        %520 = vmatpush.bf16.msra.mxu0 0
        %521 = vmatpush.bf16.msra.mxu0 0
        %522 = vmatpush.bf16.msra.mxu0 0
        %523 = vmatpush.bf16.msra.mxu0 %v493
        %524 = vmatpush.bf16.msra.mxu0 %v491
        %525 = vmatmul.bf16.gmra.mxu0 %v502
        %v526 = vpop.f32.mrf.mxu0
        %v527 = vadd.f32 %v498, %v526
        %v528 = vpop.f32.mrf.mxu0
        %529 = vdwg.mxu0
        %v530 = vsub.f32 0.0, %v514
        %v531 = vsub.f32 0.0, %v527
        %v532 = vmul.f32 %v530, 1.442695
        %v533 = vpow.pop %v532
        %v534 = vmul.f32 %v531, 1.442695
        %v535 = vpow.pop %v534
        %v536 = vadd.f32 %v533, 1.0
        %v537 = vadd.f32 %v535, 1.0
        %v538 = vrcp.pop %v536
        %v539 = vrcp.pop %v537
        %540 = vst [vmem:[%s304] sm:$0xff] %v538
        %541 = vst [vmem:[%s304 + $0x8] sm:$0xff] %v539
        %vm542 = vcmp.gt.f32.partialorder %v514, 0.0
        %vm543 = vcmp.gt.f32.partialorder %v527, 0.0
        %v544 = vsel %vm542, 1, 0
        %v545 = vsel %vm543, 1, 0
        %v546 = vcvt.s32.f32 %v544
        %v547 = vcvt.s32.f32 %v545
        %v548 = vrot.slane %v546, 4
        %v549 = vadd.f32 %v546, %v548
        %v550 = vrot.slane %v549, 2
        %v551 = vadd.f32 %v549, %v550
        %v552 = vrot.slane %v551, 1
        %v553 = vadd.f32 %v551, %v552
        %v554 = vrot.slane %v547, 4
        %v555 = vadd.f32 %v547, %v554
        %v556 = vrot.slane %v555, 2
        %v557 = vadd.f32 %v555, %v556
        %v558 = vrot.slane %v557, 1
        %v559 = vadd.f32 %v557, %v558
        %v560 = vcvt.f32.s32.to.zero.pseudo %v553
        %v561 = vcvt.f32.s32.to.zero.pseudo %v559
        %v562 = vrot.slane %v561, 7
        %vm563 = vcmask 1040384
        %v564 = vsel %vm563, %v560, %v562
        %v565 = vlaneseq
        %vm566 = vcmp.ge.s32.totalorder %v565, 0
        %vm567 = vcmp.lt.s32.totalorder %v565, 256
        %vm568 = vmand %vm566, %vm567
        %569 = vst.msk [vmem:[%s311] sm:$0x3] %vm568, %v564
        %v570 = vmul.f32 %v553, 4.3820267
        %v571 = vmul.f32 %v559, 4.3820267
        %v572 = vrcp.pop 8.0
        %v573 = vmul.f32 8.0, %v572
        %v574 = vsub.f32 1.0, %v573
        %v575 = vmul.f32 %v572, %v574
        %v576 = vadd.f32 %v572, %v575
        %vm577 = vweird.f32 %v572
        %v578 = vsel %vm577, %v572, %v576
        %v579 = vmul.f32 %v570, %v578
        %v580 = vmul.f32 %v571, %v578
        %v581 = vmul.f32 %v579, 1.442695
        %v582 = vpow.pop %v581
        %v583 = vmul.f32 %v580, 1.442695
        %v584 = vpow.pop %v583
        %v585 = vadd.f32 %v553, 1.0
        %v586 = vadd.f32 %v559, 1.0
        %v587 = vmul.f32 %v585, 4.3820267
        %v588 = vmul.f32 %v586, 4.3820267
        %v589 = vmul.f32 %v587, %v578
        %v590 = vmul.f32 %v588, %v578
        %v591 = vmul.f32 %v589, 1.442695
        %v592 = vpow.pop %v591
        %v593 = vmul.f32 %v590, 1.442695
        %v594 = vpow.pop %v593
        %v595 = vadd.f32 %v582, %v592
        %v596 = vadd.f32 %v584, %v594
        %v597 = vmul.f32 %v595, 0.5
        %v598 = vmul.f32 %v596, 0.5
        %v599 = vsub.f32 %v597, 1.0
        %v600 = vsub.f32 %v598, 1.0
        %v603 = vrot.slane %v600, 7
        %v604 = vsel %vm563, %v599, %v603
        %606 = vst.msk [vmem:[%s318] sm:$0x3] %vm568, %v604
        %s607 = sand.u32 %s159, 1
        %s608 = scalar_lea.sflag [#allocation3], %s607
        %s609 = sand.u32 %s159, 1
        %s610 = smul.addr %s609, 16
        %s611 = scalar_lea.vmem [#allocation2], %s610
        %s612 = sand.u32 %s25, 1
        %s613 = scalar_lea.sflag [#allocation5], %s612
        %s614 = sand.u32 %s187, 1
        %s615 = smul.addr %s614, 2
        %s616 = scalar_lea.vmem [#allocation4], %s615
        %s617 = sand.u32 %s25, 1
        %s618 = scalar_lea.sflag [#allocation5], %s617
        %s619 = sand.u32 %s215, 1
        %s620 = smul.addr %s619, 2
        %s621 = scalar_lea.vmem [#allocation6], %s620
        // Predicated region
        $region41: #{tpu_custom_call.1} parent=39 // pred_check
          %p622 = pneg %p169
        $region42: #{tpu_custom_call.1} parent=39 // pred_check_branch
          %624 = sbr.rel (%p622) target = $region44
        $region43: #{tpu_custom_call.1} parent=39 // pred_region
          %s625 = smul.u32 2, %s30
          %627 = vsyncadd %s608, 0
          %s628 = smul.addr %s29, 2
          %s629 = sadd.s32 %s625, %s628
          %s630 = smul.addr %s629, 8
          %s631 = scalar_lea.hbm %s5, %s630
          %s633 = sshll.u32 %s611, 4
          %s634 = int_to_ptr.vmem [resolvable:$true] %s633
          %s635 = sshll.u32 %s631, 4
          %s636 = int_to_ptr.hbm [resolvable:$true] %s635
          %638 = dma.vmem_to_hbm [thread:$0]  %s634, 256, %s636, %s608
        $region44: #{tpu_custom_call.1} parent=39 // pred_fallthru
          _
        // Predicated region
        $region45: #{tpu_custom_call.1} parent=39 // pred_check
          %p639 = pneg %p197
        $region46: #{tpu_custom_call.1} parent=39 // pred_check_branch
          %641 = sbr.rel (%p639) target = $region48
        $region47: #{tpu_custom_call.1} parent=39 // pred_region
          %s642 = smul.u32 2, %s30
          %644 = vsyncadd %s613, 0
          %s645 = smul.addr %s29, 2
          %s646 = sadd.s32 %s642, %s645
          %s647 = scalar_lea.hbm %s6, %s646
          %s649 = sshll.u32 %s616, 4
          %s650 = int_to_ptr.vmem [resolvable:$true] %s649
          %s651 = sshll.u32 %s647, 4
          %s652 = int_to_ptr.hbm [resolvable:$true] %s651
          %654 = dma.vmem_to_hbm [thread:$0]  %s650, 32, %s652, %s613
        $region48: #{tpu_custom_call.1} parent=39 // pred_fallthru
          _
        // Predicated region
        $region49: #{tpu_custom_call.1} parent=39 // pred_check
          %p655 = pneg %p225
        $region50: #{tpu_custom_call.1} parent=39 // pred_check_branch
          %657 = sbr.rel (%p655) target = $region52
        $region51: #{tpu_custom_call.1} parent=39 // pred_region
          %s658 = smul.u32 2, %s30
          %660 = vsyncadd %s618, 0
          %s661 = smul.addr %s29, 2
          %s662 = sadd.s32 %s658, %s661
          %s663 = scalar_lea.hbm %s7, %s662
          %s665 = sshll.u32 %s621, 4
          %s666 = int_to_ptr.vmem [resolvable:$true] %s665
          %s667 = sshll.u32 %s663, 4
          %s668 = int_to_ptr.hbm [resolvable:$true] %s667
          %670 = dma.vmem_to_hbm [thread:$0]  %s666, 32, %s668, %s618
        $region52: #{tpu_custom_call.1} parent=39 // pred_fallthru
          _
      $region40: #{tpu_custom_call.1} parent=5 // pred_fallthru
        _
      %p671 = scmp.le.s32.totalorder 2, %s20
      // Predicated region
      $region53: #{tpu_custom_call.1} parent=5 // pred_check
        %p672 = pneg %p671
      $region54: #{tpu_custom_call.1} parent=5 // pred_check_branch
        %674 = sbr.rel (%p672) target = $region56
      $region55: #{tpu_custom_call.1} parent=5 // pred_region
        %s675 = ssub.s32 %s20, 2
        // Predicated region
        $region57: #{tpu_custom_call.1} parent=55 // pred_check
          %p676 = pneg %p175
        $region58: #{tpu_custom_call.1} parent=55 // pred_check_branch
          %678 = sbr.rel (%p676) target = $region60
        $region59: #{tpu_custom_call.1} parent=55 // pred_region
          %s679 = sand.u32 %s160, 1
          %s680 = scalar_lea.sflag [#allocation3], %s679
          %s681 = sand.u32 %s160, 1
          %s682 = smul.addr %s681, 16
          %s683 = scalar_lea.vmem [#allocation2], %s682
          %685 = dma.done %s680, 256
        $region60: #{tpu_custom_call.1} parent=55 // pred_fallthru
          _
        // Predicated region
        $region61: #{tpu_custom_call.1} parent=55 // pred_check
          %p686 = pneg %p203
        $region62: #{tpu_custom_call.1} parent=55 // pred_check_branch
          %688 = sbr.rel (%p686) target = $region64
        $region63: #{tpu_custom_call.1} parent=55 // pred_region
          %s689 = sand.u32 %s26, 1
          %s690 = scalar_lea.sflag [#allocation5], %s689
          %s691 = sand.u32 %s188, 1
          %s692 = smul.addr %s691, 2
          %s693 = scalar_lea.vmem [#allocation4], %s692
          %695 = dma.done %s690, 32
        $region64: #{tpu_custom_call.1} parent=55 // pred_fallthru
          _
        // Predicated region
        $region65: #{tpu_custom_call.1} parent=55 // pred_check
          %p696 = pneg %p231
        $region66: #{tpu_custom_call.1} parent=55 // pred_check_branch
          %698 = sbr.rel (%p696) target = $region68
        $region67: #{tpu_custom_call.1} parent=55 // pred_region
          %s699 = sand.u32 %s26, 1
          %s700 = scalar_lea.sflag [#allocation5], %s699
          %s701 = sand.u32 %s216, 1
          %s702 = smul.addr %s701, 2
          %s703 = scalar_lea.vmem [#allocation6], %s702
          %705 = dma.done %s700, 32
        $region68: #{tpu_custom_call.1} parent=55 // pred_fallthru
          _
      $region56: #{tpu_custom_call.1} parent=5 // pred_fallthru
        _
    $region6: #{tpu_custom_call.1} parent=1 // loop_footer
      %s24 = sadd.s32 1, %s20
    $region7: #{tpu_custom_call.1} parent=1 // loop_footer_branch
      %19 = sbr.rel target = $region3
    $region8: #{tpu_custom_call.1} parent=1 // loop_exit
      _
    %706 = vsyncpa [#allocation3], 1
    %s707 = scalar_lea.sflag [#allocation3], 1
    %708 = vsyncpa %s707, 1
    %709 = vsyncpa [#allocation5], 1
    %s710 = scalar_lea.sflag [#allocation5], 1
    %711 = vsyncpa %s710, 1

</llo_original>
